<compile_context>
chip_gen: v6e
topology: v6e:2x2x1
jax: 0.10.0
libtpu: 0.0.40
codegen_flags: <defaults>
</compile_context>

<pallas_src>
import jax
import jax.numpy as jnp
from jax.experimental import pallas as pl
from jax.experimental.pallas import tpu as pltpu


# ---------------------------------------------------------------------------
# Kernels
# ---------------------------------------------------------------------------

def _hardswish(y):
    return y * jnp.clip(y + 3.0, 0.0, 6.0) * (1.0 / 6.0)


def _cbl1_kernel(x_ref, w_ref, b_ref, o_ref):
    """1x1 conv (channel matmul) + folded-BN shift + Hardswish.

    x_ref: (Cin, Tsp), w_ref: (Cout, Cin), b_ref: (Cout, 1), o_ref: (Cout, Tsp)
    """
    acc = jnp.dot(w_ref[...], x_ref[...], preferred_element_type=jnp.float32)
    y = acc + b_ref[...]
    o_ref[...] = _hardswish(y).astype(o_ref.dtype)


def _cbl4_kernel(x0_ref, x1_ref, x2_ref, x3_ref,
                 w0_ref, w1_ref, w2_ref, w3_ref, b_ref, o_ref):
    """cv2 applied to the (never materialized) channel concat of 4 streams."""
    acc = jnp.dot(w0_ref[...], x0_ref[...], preferred_element_type=jnp.float32)
    acc = acc + jnp.dot(w1_ref[...], x1_ref[...], preferred_element_type=jnp.float32)
    acc = acc + jnp.dot(w2_ref[...], x2_ref[...], preferred_element_type=jnp.float32)
    acc = acc + jnp.dot(w3_ref[...], x3_ref[...], preferred_element_type=jnp.float32)
    y = acc + b_ref[...]
    o_ref[...] = _hardswish(y).astype(o_ref.dtype)


def _maxpool5_same_w(x):
    c, h, w = x.shape
    neg = jnp.full((c, h, 2), -jnp.inf, x.dtype)
    xp = jnp.concatenate([neg, x, neg], axis=2)
    out = xp[:, :, 0:w]
    for i in range(1, 5):
        out = jnp.maximum(out, xp[:, :, i:i + w])
    return out


def _maxpool5_same_h(x):
    c, h, w = x.shape
    neg = jnp.full((c, 2, w), -jnp.inf, x.dtype)
    xp = jnp.concatenate([neg, x, neg], axis=1)
    out = xp[:, 0:h, :]
    for i in range(1, 5):
        out = jnp.maximum(out, xp[:, i:i + h, :])
    return out


def _maxpool5_same_2d(x):
    return _maxpool5_same_h(_maxpool5_same_w(x))


def _spp_pool_kernel(x_ref, p5_ref, p9_ref, p13_ref):
    """Stride-1 'same' max pools k=5/9/13 via cascaded 5x5 pools (SPP==SPPF)."""
    x = x_ref[...]                    # (c_, H, W)
    p5 = _maxpool5_same_2d(x)
    p9 = _maxpool5_same_2d(p5)        # 5 o 5 == 9
    p13 = _maxpool5_same_2d(p9)       # 9 o 5 == 13
    p5_ref[...] = p5.astype(p5_ref.dtype)
    p9_ref[...] = p9.astype(p9_ref.dtype)
    p13_ref[...] = p13.astype(p13_ref.dtype)


# ---------------------------------------------------------------------------
# Wrappers
# ---------------------------------------------------------------------------

def _fold_bn(w, gamma, beta, mean, var, eps, act_dtype):
    """Fold inference BN into the (bias-free) 1x1 conv weight."""
    scale = gamma / jnp.sqrt(var + eps)
    w_f = (w.astype(jnp.float32) * scale[:, None]).astype(act_dtype)
    shift = (beta - mean * scale).astype(jnp.float32).reshape(-1, 1)
    return w_f, shift


def _spatial_tile(S, target):
    if S <= target:
        return S                       # full-extent block (always legal)
    return (target // 128) * 128       # lane-aligned; last partial block masked


def _cbl_1x1(x3, w_f, shift, ts):
    """x3: (N, Cin, S) -> (N, Cout, S), fused 1x1-conv + BN + Hardswish."""
    N, Cin, S = x3.shape
    Cout = w_f.shape[0]
    grid = (N, pl.cdiv(S, ts))
    return pl.pallas_call(
        _cbl1_kernel,
        out_shape=jax.ShapeDtypeStruct((N, Cout, S), x3.dtype),
        grid_spec=pltpu.PrefetchScalarGridSpec(
            num_scalar_prefetch=0,
            grid=grid,
            in_specs=[
                pl.BlockSpec((None, Cin, ts), lambda n, s: (n, 0, s)),
                pl.BlockSpec((Cout, Cin), lambda n, s: (0, 0)),
                pl.BlockSpec((Cout, 1), lambda n, s: (0, 0)),
            ],
            out_specs=pl.BlockSpec((None, Cout, ts), lambda n, s: (n, 0, s)),
        ),
        compiler_params=pltpu.CompilerParams(
            dimension_semantics=("parallel", "parallel")),
    )(x3, w_f, shift)


def _spp_pools(x1_4d):
    """(N, c_, H, W) -> three pooled maps of the same shape (k=5, 9, 13)."""
    N, Cmid, H, W = x1_4d.shape
    spec = pl.BlockSpec((None, Cmid, H, W), lambda n: (n, 0, 0, 0))
    return pl.pallas_call(
        _spp_pool_kernel,
        out_shape=tuple(jax.ShapeDtypeStruct((N, Cmid, H, W), x1_4d.dtype)
                        for _ in range(3)),
        grid_spec=pltpu.PrefetchScalarGridSpec(
            num_scalar_prefetch=0,
            grid=(N,),
            in_specs=[spec],
            out_specs=(spec, spec, spec),
        ),
        compiler_params=pltpu.CompilerParams(dimension_semantics=("parallel",)),
    )(x1_4d)


def _cbl_1x1_cat4(streams, w_chunks, shift, ts):
    """cv2 on the virtual concat of 4 (N, c_, S) streams -> (N, Cout, S)."""
    N, Cmid, S = streams[0].shape
    Cout = w_chunks[0].shape[0]
    grid = (N, pl.cdiv(S, ts))
    act_spec = pl.BlockSpec((None, Cmid, ts), lambda n, s: (n, 0, s))
    w_spec = pl.BlockSpec((Cout, Cmid), lambda n, s: (0, 0))
    b_spec = pl.BlockSpec((Cout, 1), lambda n, s: (0, 0))
    return pl.pallas_call(
        _cbl4_kernel,
        out_shape=jax.ShapeDtypeStruct((N, Cout, S), streams[0].dtype),
        grid_spec=pltpu.PrefetchScalarGridSpec(
            num_scalar_prefetch=0,
            grid=grid,
            in_specs=[act_spec] * 4 + [w_spec] * 4 + [b_spec],
            out_specs=pl.BlockSpec((None, Cout, ts), lambda n, s: (n, 0, s)),
        ),
        compiler_params=pltpu.CompilerParams(
            dimension_semantics=("parallel", "parallel")),
    )(*streams, *w_chunks, shift)


def spp_forward(x, w1, g1, b1, m1, v1, w2, g2, b2, m2, v2,
                eps=1e-5, ts_target=512):
    """SPP forward pass.

    x : (N, C1, H, W) NCHW activations.
    w1: (c_, C1)   squeezed 1x1 conv weight of cv1 (c_ = C1 // 2).
    w2: (c2, 4*c_) squeezed 1x1 conv weight of cv2.
    g/b/m/v: BatchNorm gamma / beta / running_mean / running_var of cv1 / cv2.
    """
    N, C1, H, W = x.shape
    S = H * W
    c_ = w1.shape[0]
    c2 = w2.shape[0]
    assert w1.shape == (c_, C1) and w2.shape == (c2, 4 * c_)

    ts = _spatial_tile(S, ts_target)

    w1f, shift1 = _fold_bn(w1, g1, b1, m1, v1, eps, x.dtype)
    w2f, shift2 = _fold_bn(w2, g2, b2, m2, v2, eps, x.dtype)
    w2_chunks = [w2f[:, i * c_:(i + 1) * c_] for i in range(4)]

    # cv1: 1x1 conv + BN + Hardswish (channel-major matmul over spatial tiles).
    x1 = _cbl_1x1(x.reshape(N, C1, S), w1f, shift1, ts)

    # max pools 5 / 9 / 13 (stride 1, 'same'); x1 read from HBM once.
    p5, p9, p13 = _spp_pools(x1.reshape(N, c_, H, W))

    # cv2 over the virtual channel concat [x1, p5, p9, p13].
    streams = (x1,
               p5.reshape(N, c_, S),
               p9.reshape(N, c_, S),
               p13.reshape(N, c_, S))
    out = _cbl_1x1_cat4(streams, w2_chunks, shift2, ts)
    return out.reshape(N, c2, H, W)


# ---------------------------------------------------------------------------
# Pure-JAX reference (matches the PyTorch module's forward)
# ---------------------------------------------------------------------------

def _reference(x, w1, g1, b1, m1, v1, w2, g2, b2, m2, v2, eps=1e-5):
    def cbl(xn, w, gamma, beta, mean, var):
        y = jnp.einsum('nchw,oc->nohw', xn, w)
        y = ((y - mean[None, :, None, None])
             / jnp.sqrt(var[None, :, None, None] + eps)
             * gamma[None, :, None, None] + beta[None, :, None, None])
        return y * jnp.clip(y + 3.0, 0.0, 6.0) / 6.0

    def maxpool(xn, k):
        p = k // 2
        return jax.lax.reduce_window(
            xn, -jnp.inf, jax.lax.max,
            window_dimensions=(1, 1, k, k),
            window_strides=(1, 1, 1, 1),
            padding=((0, 0), (0, 0), (p, p), (p, p)))

    x1 = cbl(x, w1, g1, b1, m1, v1)
    cat = jnp.concatenate(
        [x1, maxpool(x1, 5), maxpool(x1, 9), maxpool(x1, 13)], axis=1)
    return cbl(cat, w2, g2, b2, m2, v2)


if __name__ == "__main__":
    key = jax.random.PRNGKey(0)
    ks = jax.random.split(key, 11)

    N, C1, H, W = 2, 4, 16, 16
    C2 = 32
    c_ = C1 // 2

    x = jax.random.normal(ks[0], (N, C1, H, W), dtype=jnp.float32)

    w1 = 0.3 * jax.random.normal(ks[1], (c_, C1), dtype=jnp.float32)
    g1 = 1.0 + 0.1 * jax.random.normal(ks[2], (c_,), dtype=jnp.float32)
    b1 = 0.1 * jax.random.normal(ks[3], (c_,), dtype=jnp.float32)
    m1 = 0.05 * jax.random.normal(ks[4], (c_,), dtype=jnp.float32)
    v1 = 1.0 + 0.1 * jax.random.uniform(ks[5], (c_,), dtype=jnp.float32)

    w2 = 0.3 * jax.random.normal(ks[6], (C2, 4 * c_), dtype=jnp.float32)
    g2 = 1.0 + 0.1 * jax.random.normal(ks[7], (C2,), dtype=jnp.float32)
    b2 = 0.1 * jax.random.normal(ks[8], (C2,), dtype=jnp.float32)
    m2 = 0.05 * jax.random.normal(ks[9], (C2,), dtype=jnp.float32)
    v2 = 1.0 + 0.1 * jax.random.uniform(ks[10], (C2,), dtype=jnp.float32)

    out = spp_forward(x, w1, g1, b1, m1, v1, w2, g2, b2, m2, v2)
    out = jax.block_until_ready(out)

    ref = _reference(x, w1, g1, b1, m1, v1, w2, g2, b2, m2, v2)
    assert out.shape == (N, C2, H, W), out.shape
    assert jnp.allclose(out, ref, atol=1e-4, rtol=1e-4), \
        float(jnp.max(jnp.abs(out - ref)))

    print("KERNEL_OK")
</pallas_src>

<mosaic_0001>
module attributes {stable_mosaic.version = 11 : i64} {
  func.func @_cbl1_kernel(%arg0: i32, %arg1: i32, %arg2: memref<1x4x256xf32, #tpu.memory_space<vmem>>, %arg3: memref<2x4xf32, #tpu.memory_space<vmem>>, %arg4: memref<2x1xf32, #tpu.memory_space<vmem>>, %arg5: memref<1x2x256xf32, #tpu.memory_space<vmem>>) attributes {dimension_semantics = [#tpu.dimension_semantics<parallel>, #tpu.dimension_semantics<parallel>], iteration_bounds = array<i64: 2, 1>, scalar_prefetch = 0 : i64, scratch_operands = 0 : i64, tpu.core_type = #tpu.core_type<tc>, window_params = [{transform_indices = @transform_0, window_bounds = array<i64: 1, 4, 256>}, {pipeline_mode = #tpu.pipeline_mode<synchronous>, transform_indices = @transform_1, window_bounds = array<i64: 2, 4>}, {pipeline_mode = #tpu.pipeline_mode<synchronous>, transform_indices = @transform_2, window_bounds = array<i64: 2, 1>}, {transform_indices = @transform_3, window_bounds = array<i64: 1, 2, 256>}]} {
    %c0 = arith.constant 0 : index
    %c0_0 = arith.constant 0 : index
    %0 = vector.load %arg3[%c0, %c0_0] : memref<2x4xf32, #tpu.memory_space<vmem>>, vector<2x4xf32>
    %c0_1 = arith.constant 0 : index
    %c0_2 = arith.constant 0 : index
    %c0_3 = arith.constant 0 : index
    %1 = vector.load %arg2[%c0_1, %c0_2, %c0_3] : memref<1x4x256xf32, #tpu.memory_space<vmem>>, vector<1x4x256xf32>
    %2 = vector.shape_cast %1 : vector<1x4x256xf32> to vector<4x256xf32>
    %cst = arith.constant dense<0.000000e+00> : vector<2x256xf32>
    %3 = tpu.matmul %0, %2, %cst {dimension_numbers = #tpu.dot_dimension_numbers<[1], [0], [0], [1], [0, 0, 1, 1], [], []>} : vector<2x4xf32>, vector<4x256xf32>, vector<2x256xf32> -> vector<2x256xf32>
    %c0_4 = arith.constant 0 : index
    %c0_5 = arith.constant 0 : index
    %4 = vector.load %arg4[%c0_4, %c0_5] : memref<2x1xf32, #tpu.memory_space<vmem>>, vector<2x1xf32>
    %5 = vector.broadcast %4 : vector<2x1xf32> to vector<2x256xf32>
    %6 = arith.addf %3, %5 : vector<2x256xf32>
    %cst_6 = arith.constant 3.000000e+00 : f32
    %7 = vector.broadcast %cst_6 : f32 to vector<2x256xf32>
    %8 = arith.addf %6, %7 : vector<2x256xf32>
    %cst_7 = arith.constant 0.000000e+00 : f32
    %cst_8 = arith.constant 6.000000e+00 : f32
    %9 = vector.broadcast %cst_7 : f32 to vector<2x256xf32>
    %10 = arith.maximumf %9, %8 : vector<2x256xf32>
    %11 = vector.broadcast %cst_8 : f32 to vector<2x256xf32>
    %12 = arith.minimumf %11, %10 : vector<2x256xf32>
    %13 = arith.mulf %6, %12 : vector<2x256xf32>
    %cst_9 = arith.constant 0.166666672 : f32
    %14 = vector.broadcast %cst_9 : f32 to vector<2x256xf32>
    %15 = arith.mulf %13, %14 : vector<2x256xf32>
    %c0_10 = arith.constant 0 : index
    %c0_11 = arith.constant 0 : index
    %c0_12 = arith.constant 0 : index
    %16 = vector.load %arg5[%c0_10, %c0_11, %c0_12] : memref<1x2x256xf32, #tpu.memory_space<vmem>>, vector<1x2x256xf32>
    %17 = vector.shape_cast %16 : vector<1x2x256xf32> to vector<2x256xf32>
    %18 = vector.shape_cast %15 : vector<2x256xf32> to vector<1x2x256xf32>
    tpu.vector_store %arg5[%c0_10, %c0_11, %c0_12], %18 {strides = array<i32>} : memref<1x2x256xf32, #tpu.memory_space<vmem>>, vector<1x2x256xf32>,
    return
  }
  func.func @transform_0(%arg0: i32, %arg1: i32) -> (i32, i32, i32) {
    %c0_i32 = arith.constant 0 : i32
    %c0_i32_0 = arith.constant 0 : i32
    return %arg0, %c0_i32, %arg1 : i32, i32, i32
  }
  func.func @transform_1(%arg0: i32, %arg1: i32) -> (i32, i32) {
    %c0_i32 = arith.constant 0 : i32
    %c0_i32_0 = arith.constant 0 : i32
    %c0_i32_1 = arith.constant 0 : i32
    return %c0_i32, %c0_i32_0 : i32, i32
  }
  func.func @transform_2(%arg0: i32, %arg1: i32) -> (i32, i32) {
    %c0_i32 = arith.constant 0 : i32
    %c0_i32_0 = arith.constant 0 : i32
    %c0_i32_1 = arith.constant 0 : i32
    return %c0_i32, %c0_i32_0 : i32, i32
  }
  func.func @transform_3(%arg0: i32, %arg1: i32) -> (i32, i32, i32) {
    %c0_i32 = arith.constant 0 : i32
    %c0_i32_0 = arith.constant 0 : i32
    return %arg0, %c0_i32, %arg1 : i32, i32, i32
  }
}

</mosaic_0001>

<llo_original>
// kernel: tpu_custom_call.1
$region0: #{tpu_custom_call.1}
  #allocation0 [shape = 'u32[]', space=smem, size = 0x4, offset = 0x4, fixed_abs, tag = 'smem constant byte address 0x4 - core index']
  #allocation1 [shape = 'u32[144,128]{1,0:T(1,128)}', space=vmem, size = 0x12000, scoped, tag = 'internal scratch']
  %s0 = inlined_call_operand.hbm [shape: f32[2,4,256], index: 0, kind: input, shape index: {}]
  %s1 = inlined_call_operand.vmem [shape: f32[2,4], index: 1, kind: input, shape index: {}]
  %s2 = inlined_call_operand.vmem [shape: f32[2,1], index: 2, kind: input, shape index: {}]
  %s3 = inlined_call_operand.hbm [shape: f32[2,2,256], index: 3, kind: output, shape index: {}]
  %s4 = sld [smem:[#allocation0]]
  $region49: #{tpu_custom_call.1} parent=0
    _
  %s6 = ssub.s32 1, %s4
  %s7 = scalar_select 0, %s6, %s4
  $region1: #{tpu_custom_call.1} parent=0
    #allocation2 [shape = 'u8[8192]{0}', space=vmem, size = 0x2000, scoped, tag = 'input window, operand 0']
    #allocation3 [shape = 's32[2]{0}', space=sflag, size = 0x8, scoped, tag = 'scoped memory for tpu_custom_call.1']
    #allocation4 [shape = 's32[2]{0}', space=sflag, size = 0x8, scoped, tag = 'scoped memory for tpu_custom_call.1']
    #allocation5 [shape = 'u8[4096]{0}', space=vmem, size = 0x1000, scoped, tag = 'output window, operand 0']
    %8 = vsyncpa [#allocation3], 0
    %s9 = scalar_lea.sflag [#allocation3], 1
    %10 = vsyncpa %s9, 0
    %11 = vsyncpa [#allocation4], 0
    %s12 = scalar_lea.sflag [#allocation4], 1
    %13 = vsyncpa %s12, 0
    loop: start=0, step=1, limit=4
    $region2: #{tpu_custom_call.1} parent=1 // loop_pre_header
      _
    $region3: #{tpu_custom_call.1} parent=1 // loop_header
      %s15 = sphi 0, %s19
      %p16 = scmp.ge.s32.totalorder %s15, 4
      %s22 = sphi 0, %s34
      %s23 = sphi 0, %s30
      %s24 = sphi 0, %s22
      %s25 = sphi 0, %s23
      %s26 = sphi 0, %s24
      %s27 = sphi 0, %s25
      %s39 = sphi 0, %s41
      %s42 = sphi 0, %s39
      %s43 = sphi 0, %s42
      %s59 = sphi 0, %s43
      %s63 = sphi 0, %s63
      %s65 = sphi 0, %s63
      %s66 = sphi 0, %s65
      %s80 = sphi 0, %s66
      %s84 = sphi 0, %s84
      %s86 = sphi 0, %s84
      %s87 = sphi 0, %s86
      %s101 = sphi 0, %s87
      %s109 = sphi 0, %s111
      %s112 = sphi 0, %s109
      %s113 = sphi 0, %s112
      %s129 = sphi 0, %s113
    $region4: #{tpu_custom_call.1} parent=1 // loop_header_branch
      %18 = sbr.rel (%p16) target = $region8
    $region5: #{tpu_custom_call.1} parent=1 // loop_body
      %s20 = ssub.s32 %s15, 1
      %s21 = ssub.s32 %s15, 2
      %s28 = sadd.s32 1, %s23
      %p29 = scmp.ge.s32.totalorder %s28, 1
      %s30 = scalar_select %p29, 0, %s28
      %s31 = sadd.s32 1, %s22
      %s32 = scalar_select %p29, %s31, %s22
      %p33 = scmp.ge.s32.totalorder %s32, 2
      %s34 = scalar_select %p33, 0, %s32
      %s35 = ssub.s32 %s22, %s34
      %s36 = ssub.s32 %s23, %s30
      %s37 = sor.u32 %s35, %s36
      %p38 = scmp.eq.s32.totalorder %s37, 0
      %s40 = sadd.s32 %s39, 1
      %s41 = scalar_select %p38, %s39, %s40
      %p44 = pneg %p38
      %p45 = scmp.eq.s32.totalorder %s15, 1
      %p46 = por %p44, %p45
      %p47 = scmp.ne.s32.totalorder %s39, %s42
      %p48 = scmp.eq.s32.totalorder %s15, 0
      %p49 = por %p47, %p48
      %p50 = scmp.ne.s32.totalorder %s39, %s42
      %p51 = scmp.eq.s32.totalorder %s20, 1
      %p52 = por %p50, %p51
      %p53 = scmp.ne.s32.totalorder %s42, %s43
      %p54 = scmp.eq.s32.totalorder %s20, 0
      %p55 = por %p53, %p54
      %p56 = scmp.ne.s32.totalorder %s42, %s43
      %p57 = scmp.eq.s32.totalorder %s21, 1
      %p58 = por %p56, %p57
      %p60 = scmp.ne.s32.totalorder %s43, %s59
      %p61 = scmp.eq.s32.totalorder %s21, 0
      %p62 = por %p60, %p61
      %s64 = sadd.s32 %s63, 1
      %p67 = scmp.eq.s32.totalorder %s15, 1
      %p68 = scmp.ne.s32.totalorder %s63, %s65
      %p69 = scmp.eq.s32.totalorder %s15, 0
      %p70 = por %p68, %p69
      %p71 = scmp.ne.s32.totalorder %s63, %s65
      %p72 = scmp.eq.s32.totalorder %s20, 1
      %p73 = por %p71, %p72
      %p74 = scmp.ne.s32.totalorder %s65, %s66
      %p75 = scmp.eq.s32.totalorder %s20, 0
      %p76 = por %p74, %p75
      %p77 = scmp.ne.s32.totalorder %s65, %s66
      %p78 = scmp.eq.s32.totalorder %s21, 1
      %p79 = por %p77, %p78
      %p81 = scmp.ne.s32.totalorder %s66, %s80
      %p82 = scmp.eq.s32.totalorder %s21, 0
      %p83 = por %p81, %p82
      %s85 = sadd.s32 %s84, 1
      %p88 = scmp.eq.s32.totalorder %s15, 1
      %p89 = scmp.ne.s32.totalorder %s84, %s86
      %p90 = scmp.eq.s32.totalorder %s15, 0
      %p91 = por %p89, %p90
      %p92 = scmp.ne.s32.totalorder %s84, %s86
      %p93 = scmp.eq.s32.totalorder %s20, 1
      %p94 = por %p92, %p93
      %p95 = scmp.ne.s32.totalorder %s86, %s87
      %p96 = scmp.eq.s32.totalorder %s20, 0
      %p97 = por %p95, %p96
      %p98 = scmp.ne.s32.totalorder %s86, %s87
      %p99 = scmp.eq.s32.totalorder %s21, 1
      %p100 = por %p98, %p99
      %p102 = scmp.ne.s32.totalorder %s87, %s101
      %p103 = scmp.eq.s32.totalorder %s21, 0
      %p104 = por %p102, %p103
      %s105 = ssub.s32 %s22, %s34
      %s106 = ssub.s32 %s23, %s30
      %s107 = sor.u32 %s105, %s106
      %p108 = scmp.eq.s32.totalorder %s107, 0
      %s110 = sadd.s32 %s109, 1
      %s111 = scalar_select %p108, %s109, %s110
      %p114 = pneg %p108
      %p115 = scmp.eq.s32.totalorder %s15, 1
      %p116 = por %p114, %p115
      %p117 = scmp.ne.s32.totalorder %s109, %s112
      %p118 = scmp.eq.s32.totalorder %s15, 0
      %p119 = por %p117, %p118
      %p120 = scmp.ne.s32.totalorder %s109, %s112
      %p121 = scmp.eq.s32.totalorder %s20, 1
      %p122 = por %p120, %p121
      %p123 = scmp.ne.s32.totalorder %s112, %s113
      %p124 = scmp.eq.s32.totalorder %s20, 0
      %p125 = por %p123, %p124
      %p126 = scmp.ne.s32.totalorder %s112, %s113
      %p127 = scmp.eq.s32.totalorder %s21, 1
      %p128 = por %p126, %p127
      %p130 = scmp.ne.s32.totalorder %s113, %s129
      %p131 = scmp.eq.s32.totalorder %s21, 0
      %p132 = por %p130, %p131
      %p133 = scmp.le.s32.totalorder 1, %s15
      %p134 = scmp.lt.s32.totalorder %s15, 3
      %p135 = pnand %p133, %p134
      %p136 = pneg %p135
      // Predicated region
      $region9: #{tpu_custom_call.1} parent=5 // pred_check
        _
      $region10: #{tpu_custom_call.1} parent=5 // pred_check_branch
        %138 = sbr.rel (%p135) target = $region12
      $region11: #{tpu_custom_call.1} parent=5 // pred_region
        %s139 = ssub.s32 %s15, 1
        // Predicated region
        $region13: #{tpu_custom_call.1} parent=11 // pred_check
          %p140 = pneg %p76
        $region14: #{tpu_custom_call.1} parent=11 // pred_check_branch
          %142 = sbr.rel (%p140) target = $region16
        $region15: #{tpu_custom_call.1} parent=11 // pred_region
          _
        $region16: #{tpu_custom_call.1} parent=11 // pred_fallthru
          _
        // Predicated region
        $region17: #{tpu_custom_call.1} parent=11 // pred_check
          %p143 = pneg %p97
        $region18: #{tpu_custom_call.1} parent=11 // pred_check_branch
          %145 = sbr.rel (%p143) target = $region20
        $region19: #{tpu_custom_call.1} parent=11 // pred_region
          _
        $region20: #{tpu_custom_call.1} parent=11 // pred_fallthru
          _
      $region12: #{tpu_custom_call.1} parent=5 // pred_fallthru
        _
      %p146 = scmp.lt.s32.totalorder %s15, 2
      // Predicated region
      $region21: #{tpu_custom_call.1} parent=5 // pred_check
        %p147 = pneg %p146
      $region22: #{tpu_custom_call.1} parent=5 // pred_check_branch
        %149 = sbr.rel (%p147) target = $region24
      $region23: #{tpu_custom_call.1} parent=5 // pred_region
        // Predicated region
        $region25: #{tpu_custom_call.1} parent=23 // pred_check
          %p150 = pneg %p49
        $region26: #{tpu_custom_call.1} parent=23 // pred_check_branch
          %152 = sbr.rel (%p150) target = $region28
        $region27: #{tpu_custom_call.1} parent=23 // pred_region
          %s153 = sand.u32 %s39, 1
          %s154 = scalar_lea.sflag [#allocation3], %s153
          %s155 = sand.u32 %s39, 1
          %s156 = smul.addr %s155, 8
          %s157 = scalar_lea.vmem [#allocation2], %s156
          %s158 = smul.u32 2, %s23
          %s160 = ssub.s32 128, 128
          %161 = vsyncadd %s154, %s160
          %s162 = smul.addr %s22, 2
          %s163 = sadd.s32 %s158, %s162
          %s164 = smul.addr %s163, 64
          %s165 = scalar_lea.hbm %s0, %s164
          %s167 = sshll.u32 %s157, 4
          %s168 = int_to_ptr.vmem [resolvable:$true] %s167
          %170 = dma.hbm_to_vmem [thread:$0]  %s165, 128, %s168, %s154
        $region28: #{tpu_custom_call.1} parent=23 // pred_fallthru
          _
      $region24: #{tpu_custom_call.1} parent=5 // pred_fallthru
        _
      %p171 = scmp.le.s32.totalorder 1, %s15
      %p172 = scmp.lt.s32.totalorder %s15, 3
      %p173 = pnand %p171, %p172
      %p174 = pneg %p173
      // Predicated region
      $region29: #{tpu_custom_call.1} parent=5 // pred_check
        _
      $region30: #{tpu_custom_call.1} parent=5 // pred_check_branch
        %176 = sbr.rel (%p173) target = $region32
      $region31: #{tpu_custom_call.1} parent=5 // pred_region
        %s177 = ssub.s32 %s15, 1
        %s178 = sand.u32 %s42, 1
        %s179 = scalar_lea.sflag [#allocation3], %s178
        %s180 = sand.u32 %s42, 1
        %s181 = smul.addr %s180, 8
        %s182 = scalar_lea.vmem [#allocation2], %s181
        // Predicated region
        $region33: #{tpu_custom_call.1} parent=31 // pred_check
          %p183 = pneg %p55
        $region34: #{tpu_custom_call.1} parent=31 // pred_check_branch
          %185 = sbr.rel (%p183) target = $region36
        $region35: #{tpu_custom_call.1} parent=31 // pred_region
          %186 = dma.done %s179, 128
        $region36: #{tpu_custom_call.1} parent=31 // pred_fallthru
          _
        %s187 = sand.u32 %s42, 1
        %s188 = scalar_lea.sflag [#allocation3], %s187
        %s189 = sand.u32 %s42, 1
        %s190 = smul.addr %s189, 8
        %s191 = scalar_lea.vmem [#allocation2], %s190
        %p192 = pneg %p55
        %p193 = pneg %p52
        %p194 = pneg %p76
        %p195 = pneg %p73
        %p196 = pneg %p97
        %p197 = pneg %p94
        %p198 = pneg %p125
        %p199 = pneg %p122
        %s200 = sand.u32 %s112, 1
        %s201 = scalar_lea.sflag [#allocation4], %s200
        %s202 = sand.u32 %s112, 1
        %s203 = smul.addr %s202, 4
        %s204 = scalar_lea.vmem [#allocation5], %s203
        %s205 = smul.u32 2, %s25
        %s206 = smul.u32 2, %s25
        %v207 = vld [vmem:[%s1] sm:$0x3]
        %v208 = vld [vmem:[%s182] sm:$0xff]
        %v209 = vld [vmem:[%s2] sm:$0x3]
        %211 = vset.pattern.permute.xlu0 0
        %212 = vperm.xlu0 %211, %v209
        %v213 = vpop.permute.xlu0 %212
        %v216 = vcombine.high %v208, %v208
        %vm217 = vcmask 31744
        %v219 = vsel %vm217, %v207, 0
        %vm221 = vcmask 1043456
        %v222 = vsel %vm221, %v208, 0
        %v224 = vsel %vm221, %v216, 0
        %226 = vmatprep.subr.mxu0 0.0
        %227 = vmatpush1.msra.mxu0 0.0
        %228 = vmatprep.subr.mxu0 0.0
        %229 = vmatpush1.msra.mxu0 0.0
        %230 = vmatprep.subr.mxu0 0.0
        %231 = vmatpush1.msra.mxu0 0.0
        %232 = vmatprep.subr.mxu0 0.0
        %233 = vmatpush1.msra.mxu0 0.0
        %234 = vmatprep.subr.mxu0 0.0
        %235 = vmatpush1.msra.mxu0 0.0
        %236 = vmatprep.subr.mxu0 0.0
        %237 = vmatpush1.msra.mxu0 0.0
        %238 = vmatprep.subr.mxu0 0.0
        %239 = vmatpush1.msra.mxu0 0.0
        %240 = vmatprep.subr.mxu0 0.0
        %241 = vmatpush1.msra.mxu0 0.0
        %242 = vmatprep.subr.mxu0 0.0
        %243 = vmatpush1.msra.mxu0 0.0
        %244 = vmatprep.subr.mxu0 0.0
        %245 = vmatpush1.msra.mxu0 0.0
        %246 = vmatprep.subr.mxu0 0.0
        %247 = vmatpush1.msra.mxu0 0.0
        %248 = vmatprep.subr.mxu0 0.0
        %249 = vmatpush1.msra.mxu0 0.0
        %250 = vmatprep.subr.mxu0 0.0
        %251 = vmatpush1.msra.mxu0 0.0
        %252 = vmatprep.subr.mxu0 0.0
        %253 = vmatpush1.msra.mxu0 0.0
        %254 = vmatprep.subr.mxu0 0.0
        %255 = vmatpush1.msra.mxu0 0.0
        %256 = vmatprep.subr.mxu0 %v224
        %257 = vmatpush1.msra.mxu0 %v222
        %258 = vmatprep.subr.mxu0 0.0
        %259 = vmatpush2.msra.mxu0 0.0
        %260 = vmatprep.subr.mxu0 0.0
        %261 = vmatpush2.msra.mxu0 0.0
        %262 = vmatprep.subr.mxu0 0.0
        %263 = vmatpush2.msra.mxu0 0.0
        %264 = vmatprep.subr.mxu0 0.0
        %265 = vmatpush2.msra.mxu0 0.0
        %266 = vmatprep.subr.mxu0 0.0
        %267 = vmatpush2.msra.mxu0 0.0
        %268 = vmatprep.subr.mxu0 0.0
        %269 = vmatpush2.msra.mxu0 0.0
        %270 = vmatprep.subr.mxu0 0.0
        %271 = vmatpush2.msra.mxu0 0.0
        %272 = vmatprep.subr.mxu0 0.0
        %273 = vmatpush2.msra.mxu0 0.0
        %274 = vmatprep.subr.mxu0 0.0
        %275 = vmatpush2.msra.mxu0 0.0
        %276 = vmatprep.subr.mxu0 0.0
        %277 = vmatpush2.msra.mxu0 0.0
        %278 = vmatprep.subr.mxu0 0.0
        %279 = vmatpush2.msra.mxu0 0.0
        %280 = vmatprep.subr.mxu0 0.0
        %281 = vmatpush2.msra.mxu0 0.0
        %282 = vmatprep.subr.mxu0 0.0
        %283 = vmatpush2.msra.mxu0 0.0
        %284 = vmatprep.subr.mxu0 0.0
        %285 = vmatpush2.msra.mxu0 0.0
        %286 = vmatprep.subr.mxu0 0.0
        %287 = vmatpush2.msra.mxu0 0.0
        %288 = vmatprep.subr.mxu0 0.0
        %289 = vmatpush2.msra.mxu0 0.0
        %290 = vmatprep.mubr.f32.mxu0 0.0
        %291 = vmatmul.mubr.f32.gmra.mxu0 %v219
        %v292 = vpop.f32.mrf.mxu0
        %v293 = vadd.f32 %v213, %v292
        %v294 = vpop.f32.mrf.mxu0
        %v295 = vadd.f32 %v213, %v294
        %296 = vdwg.mxu0
        %v297 = vadd.f32 %v293, 3.0
        %v298 = vadd.f32 %v295, 3.0
        %v299 = vmax.f32 %v297, 0.0
        %v300 = vmax.f32 %v298, 0.0
        %v301 = vmin.f32 %v299, 6.0
        %v302 = vmin.f32 %v300, 6.0
        %v303 = vmul.f32 %v293, %v301
        %v304 = vmul.f32 %v295, %v302
        %v305 = vmul.f32 %v303, 0.16666667
        %v306 = vmul.f32 %v304, 0.16666667
        %v309 = vcombine.low %v305, %v306
        %v311 = vunpack.c.l.s4 1983009808
        %v312 = vunpack.c.0.s8 %v311
        %v313 = vlaneseq
        %v314 = vshrl.u32 %v313, 7
        %v315 = vsub.s32 %v312, %v314
        %v316 = vrot.slane %v309, %v315
        %318 = vst [vmem:[%s204] sm:$0xf] %v316
        %s319 = sand.u32 %s112, 1
        %s320 = scalar_lea.sflag [#allocation4], %s319
        %s321 = sand.u32 %s112, 1
        %s322 = smul.addr %s321, 4
        %s323 = scalar_lea.vmem [#allocation5], %s322
        // Predicated region
        $region37: #{tpu_custom_call.1} parent=31 // pred_check
          %p324 = pneg %p122
        $region38: #{tpu_custom_call.1} parent=31 // pred_check_branch
          %326 = sbr.rel (%p324) target = $region40
        $region39: #{tpu_custom_call.1} parent=31 // pred_region
          %s327 = smul.u32 2, %s25
          %s329 = ssub.s32 64, 64
          %330 = vsyncadd %s320, %s329
          %s331 = smul.addr %s24, 2
          %s332 = sadd.s32 %s327, %s331
          %s333 = smul.addr %s332, 32
          %s334 = scalar_lea.hbm %s3, %s333
          %s336 = sshll.u32 %s323, 4
          %s337 = int_to_ptr.vmem [resolvable:$true] %s336
          %339 = dma.vmem_to_hbm [thread:$0]  %s337, 64, %s334, %s320
        $region40: #{tpu_custom_call.1} parent=31 // pred_fallthru
          _
      $region32: #{tpu_custom_call.1} parent=5 // pred_fallthru
        _
      %p340 = scmp.le.s32.totalorder 2, %s15
      // Predicated region
      $region41: #{tpu_custom_call.1} parent=5 // pred_check
        %p341 = pneg %p340
      $region42: #{tpu_custom_call.1} parent=5 // pred_check_branch
        %343 = sbr.rel (%p341) target = $region44
      $region43: #{tpu_custom_call.1} parent=5 // pred_region
        %s344 = ssub.s32 %s15, 2
        // Predicated region
        $region45: #{tpu_custom_call.1} parent=43 // pred_check
          %p345 = pneg %p128
        $region46: #{tpu_custom_call.1} parent=43 // pred_check_branch
          %347 = sbr.rel (%p345) target = $region48
        $region47: #{tpu_custom_call.1} parent=43 // pred_region
          %s348 = sand.u32 %s113, 1
          %s349 = scalar_lea.sflag [#allocation4], %s348
          %s350 = sand.u32 %s113, 1
          %s351 = smul.addr %s350, 4
          %s352 = scalar_lea.vmem [#allocation5], %s351
          %353 = dma.done %s349, 64
        $region48: #{tpu_custom_call.1} parent=43 // pred_fallthru
          _
      $region44: #{tpu_custom_call.1} parent=5 // pred_fallthru
        _
    $region6: #{tpu_custom_call.1} parent=1 // loop_footer
      %s19 = sadd.s32 1, %s15
    $region7: #{tpu_custom_call.1} parent=1 // loop_footer_branch
      %14 = sbr.rel target = $region3
    $region8: #{tpu_custom_call.1} parent=1 // loop_exit
      _
    %354 = vsyncpa [#allocation3], 1
    %s355 = scalar_lea.sflag [#allocation3], 1
    %356 = vsyncpa %s355, 1
    %357 = vsyncpa [#allocation4], 1
    %s358 = scalar_lea.sflag [#allocation4], 1
    %359 = vsyncpa %s358, 1

</llo_original>
